<compile_context>
chip_gen: v6e
topology: v6e:2x2x1
jax: 0.10.0
libtpu: 0.0.40
codegen_flags: <defaults>
</compile_context>

<pallas_src>
import functools

import jax
import jax.numpy as jnp
from jax.experimental import pallas as pl
from jax.experimental.pallas import tpu as pltpu

EPS = 1e-5
LANE = 128


def _round_up(n, m=LANE):
    return ((n + m - 1) // m) * m


def _pad_to(a, shape):
    pads = [(0, t - s) for s, t in zip(a.shape, shape)]
    if any(p[1] for p in pads):
        a = jnp.pad(a, pads)
    return a


# --------------------------------------------------------------------------
# Kernel
# --------------------------------------------------------------------------
def dqn_kernel(alpha_ref, x_ref, w1_ref, w2_ref, w3_ref, pv_ref, o_ref):
    a1 = alpha_ref[0]          # PReLU shared slopes, SMEM scalars
    a2 = alpha_ref[1]

    hp = w1_ref.shape[1]       # padded hidden width
    op = w3_ref.shape[1]       # padded output width

    x = x_ref[...]             # (B, in_p) bf16, lane-dense
    inv_n = 1.0 / x.shape[0]

    def bn_prelu(h, g_row, bt_row, alpha):
        # Training-mode BatchNorm1d: batch mean, biased batch variance.
        # One-pass stats (sum, sum-of-squares) on the XLU.
        # TODO(synk): E[h^2]-mean^2 can lose precision for large-mean
        # activations; switch to centered/Welford stats if warranted.
        s = jnp.sum(h, axis=0, keepdims=True)
        ss = jnp.sum(h * h, axis=0, keepdims=True)
        mean = s * inv_n
        var = jnp.maximum(ss * inv_n - mean * mean, 0.0)
        # Fold the BN affine into one per-feature scale/shift (row math ~free).
        scale = g_row * jax.lax.rsqrt(var + EPS)
        shift = bt_row - mean * scale
        h = h * scale + shift                       # 2 full-tile VPU ops
        return jnp.where(h >= 0, h, alpha * h)      # PReLU, shared slope

    # layer 1: Linear (bias dropped: cancels in BN) -> BN -> PReLU
    h = jnp.dot(x, w1_ref[...], preferred_element_type=jnp.float32)
    h = bn_prelu(h, pv_ref[0:1, :hp], pv_ref[1:2, :hp], a1)

    # layer 2: Linear (bias dropped) -> BN -> PReLU
    h = jnp.dot(h.astype(jnp.bfloat16), w2_ref[...],
                preferred_element_type=jnp.float32)
    h = bn_prelu(h, pv_ref[2:3, :hp], pv_ref[3:4, :hp], a2)

    # layer 3: Linear (+ bias)
    out = jnp.dot(h.astype(jnp.bfloat16), w3_ref[...],
                  preferred_element_type=jnp.float32) + pv_ref[4:5, :op]
    o_ref[...] = out.astype(o_ref.dtype)            # (B, 128*k) unmasked vst


# --------------------------------------------------------------------------
# One-time parameter prep (hoisted out of the per-call wrapper)
# --------------------------------------------------------------------------
def prepare_params(params):
    """Lane-pad + bf16-cast weights and pack per-feature rows. Call ONCE."""
    (w1, b1, g1, bt1, a1, w2, b2, g2, bt2, a2, w3, b3) = params
    del b1, b2  # Linear biases cancel exactly under training-mode BatchNorm.

    in_dim, hidden = w1.shape
    out_dim = w3.shape[1]
    in_p, h_p, o_p = _round_up(in_dim), _round_up(hidden), _round_up(out_dim)
    p = max(h_p, o_p)

    # Zero-padding is exact: padded weight rows/cols are zero, padded gamma is
    # zero so padded BN columns stay exactly zero through every layer.
    w1p = _pad_to(w1, (in_p, h_p)).astype(jnp.bfloat16)
    w2p = _pad_to(w2, (h_p, h_p)).astype(jnp.bfloat16)
    w3p = _pad_to(w3, (h_p, o_p)).astype(jnp.bfloat16)

    def row(v):
        return _pad_to(v.reshape(1, -1).astype(jnp.float32), (1, p))

    # Packed per-feature rows: [g1, bt1, g2, bt2, b3] + 3 zero rows -> one
    # (8, 128) f32 vreg tile when hidden/output pad to 128.
    pv = jnp.concatenate(
        [row(g1), row(bt1), row(g2), row(bt2), row(b3),
         jnp.zeros((3, p), jnp.float32)], axis=0)

    # PReLU slopes as SMEM scalars (shared-slope PyTorch default).
    # TODO(synk): per-channel PReLU (num_parameters=C) would need a pv row.
    alphas = jnp.concatenate([a1.reshape(-1)[:1],
                              a2.reshape(-1)[:1]]).astype(jnp.float32)

    prepped = (alphas, w1p, w2p, w3p, pv)
    meta = (in_p, out_dim, o_p)
    return jax.block_until_ready(prepped), meta


# --------------------------------------------------------------------------
# Per-step forward
# --------------------------------------------------------------------------
@functools.partial(jax.jit, static_argnums=2)
def dqn_forward(x, prepped, meta):
    alphas, w1p, w2p, w3p, pv = prepped
    in_p, out_dim, o_p = meta
    B = x.shape[0]
    h_p = w1p.shape[1]

    xp = _pad_to(x, (B, in_p)).astype(jnp.bfloat16)   # only per-call data prep

    flops = 2 * B * (in_p * h_p + h_p * h_p + h_p * o_p)
    bytes_accessed = (2 * (xp.size + w1p.size + w2p.size + w3p.size)
                      + 4 * (pv.size + alphas.size + B * o_p))

    vmem = pl.BlockSpec(memory_space=pltpu.MemorySpace.VMEM)
    smem = pl.BlockSpec(memory_space=pltpu.MemorySpace.SMEM)

    out = pl.pallas_call(
        dqn_kernel,
        out_shape=jax.ShapeDtypeStruct((B, o_p), jnp.float32),
        in_specs=[smem, vmem, vmem, vmem, vmem, vmem],
        out_specs=vmem,
        cost_estimate=pl.CostEstimate(
            flops=flops, transcendentals=0, bytes_accessed=bytes_accessed),
    )(alphas, xp, w1p, w2p, w3p, pv)

    return out[:, :out_dim]


# --------------------------------------------------------------------------
# Params + pure-JAX reference (PyTorch-equivalent semantics, f32)
# --------------------------------------------------------------------------
def init_params(key, input_dim, output_dim, hidden_dim):
    ks = jax.random.split(key, 6)
    s1 = 1.0 / jnp.sqrt(input_dim)
    s2 = 1.0 / jnp.sqrt(hidden_dim)
    # Linear weights stored as (in, out) (PyTorch is (out, in); transposed glue)
    w1 = jax.random.uniform(ks[0], (input_dim, hidden_dim), jnp.float32, -s1, s1)
    b1 = jax.random.uniform(ks[1], (1, hidden_dim), jnp.float32, -s1, s1)
    g1 = jnp.ones((1, hidden_dim), jnp.float32)       # BatchNorm gamma
    bt1 = jnp.zeros((1, hidden_dim), jnp.float32)     # BatchNorm beta
    a1 = jnp.full((1, 1), 0.25, jnp.float32)          # PReLU slope

    w2 = jax.random.uniform(ks[2], (hidden_dim, hidden_dim), jnp.float32, -s2, s2)
    b2 = jax.random.uniform(ks[3], (1, hidden_dim), jnp.float32, -s2, s2)
    g2 = jnp.ones((1, hidden_dim), jnp.float32)
    bt2 = jnp.zeros((1, hidden_dim), jnp.float32)
    a2 = jnp.full((1, 1), 0.25, jnp.float32)

    w3 = jax.random.uniform(ks[4], (hidden_dim, output_dim), jnp.float32, -s2, s2)
    b3 = jax.random.uniform(ks[5], (1, output_dim), jnp.float32, -s2, s2)
    return (w1, b1, g1, bt1, a1, w2, b2, g2, bt2, a2, w3, b3)


def dqn_reference(x, params):
    (w1, b1, g1, bt1, a1, w2, b2, g2, bt2, a2, w3, b3) = params

    def bn(h, g, bt):
        mean = jnp.mean(h, axis=0, keepdims=True)
        var = jnp.mean((h - mean) ** 2, axis=0, keepdims=True)
        return (h - mean) * jax.lax.rsqrt(var + EPS) * g + bt

    def prelu(h, a):
        return jnp.where(h >= 0, h, a * h)

    h = prelu(bn(x @ w1 + b1, g1, bt1), a1)   # biases included: must cancel
    h = prelu(bn(h @ w2 + b2, g2, bt2), a2)
    return h @ w3 + b3


if __name__ == "__main__":
    batch, input_dim, hidden_dim, output_dim = 8, 16, 32, 4

    key = jax.random.PRNGKey(0)
    kx, kp = jax.random.split(key)
    x = jax.random.normal(kx, (batch, input_dim), jnp.float32)
    params = init_params(kp, input_dim, output_dim, hidden_dim)

    prepped, meta = prepare_params(params)        # one-time weight prep
    out = dqn_forward(x, prepped, meta)           # per-step call
    jax.block_until_ready(out)

    assert out.shape == (batch, output_dim)
    ref = dqn_reference(x, params)                # f32 reference (with b1/b2)
    assert jnp.allclose(out, ref, atol=1e-1, rtol=1e-1), (
        f"max abs err {jnp.max(jnp.abs(out - ref))}")
    print("KERNEL_OK")
</pallas_src>

<mosaic_0001>
module attributes {stable_mosaic.version = 11 : i64} {
  func.func @dqn_kernel(%arg0: memref<2xf32, #tpu.memory_space<smem>>, %arg1: memref<8x128xbf16, #tpu.memory_space<vmem>>, %arg2: memref<128x128xbf16, #tpu.memory_space<vmem>>, %arg3: memref<128x128xbf16, #tpu.memory_space<vmem>>, %arg4: memref<128x128xbf16, #tpu.memory_space<vmem>>, %arg5: memref<8x128xf32, #tpu.memory_space<vmem>>, %arg6: memref<8x128xf32, #tpu.memory_space<vmem>>) attributes {dimension_semantics = [], scalar_prefetch = 0 : i64, scratch_operands = 0 : i64, tpu.core_type = #tpu.core_type<tc>} {
    %c0 = arith.constant 0 : index
    %0 = memref.load %arg0[%c0] : memref<2xf32, #tpu.memory_space<smem>>
    %c1 = arith.constant 1 : index
    %1 = memref.load %arg0[%c1] : memref<2xf32, #tpu.memory_space<smem>>
    %c0_0 = arith.constant 0 : index
    %c0_1 = arith.constant 0 : index
    %2 = vector.load %arg1[%c0_0, %c0_1] : memref<8x128xbf16, #tpu.memory_space<vmem>>, vector<8x128xbf16>
    %c0_2 = arith.constant 0 : index
    %c0_3 = arith.constant 0 : index
    %3 = vector.load %arg2[%c0_2, %c0_3] : memref<128x128xbf16, #tpu.memory_space<vmem>>, vector<128x128xbf16>
    %cst = arith.constant dense<0.000000e+00> : vector<8x128xf32>
    %4 = tpu.matmul %2, %3, %cst {dimension_numbers = #tpu.dot_dimension_numbers<[1], [0], [0], [1], [0, 0, 1, 1], [], []>} : vector<8x128xbf16>, vector<128x128xbf16>, vector<8x128xf32> -> vector<8x128xf32>
    %c0_4 = arith.constant 0 : index
    %c0_5 = arith.constant 0 : index
    %5 = vector.load %arg5[%c0_4, %c0_5] : memref<8x128xf32, #tpu.memory_space<vmem>>, vector<1x128xf32>
    %c1_6 = arith.constant 1 : index
    %c0_7 = arith.constant 0 : index
    %6 = vector.load %arg5[%c1_6, %c0_7] : memref<8x128xf32, #tpu.memory_space<vmem>>, vector<1x128xf32>
    %cst_8 = arith.constant dense<0.000000e+00> : vector<128xf32>
    %7 = vector.multi_reduction <add>, %4, %cst_8 [0] : vector<8x128xf32> to vector<128xf32>
    %8 = vector.shape_cast %7 : vector<128xf32> to vector<1x128xf32>
    %9 = arith.mulf %4, %4 : vector<8x128xf32>
    %cst_9 = arith.constant dense<0.000000e+00> : vector<128xf32>
    %10 = vector.multi_reduction <add>, %9, %cst_9 [0] : vector<8x128xf32> to vector<128xf32>
    %11 = vector.shape_cast %10 : vector<128xf32> to vector<1x128xf32>
    %cst_10 = arith.constant 1.250000e-01 : f32
    %12 = vector.broadcast %cst_10 : f32 to vector<1x128xf32>
    %13 = arith.mulf %8, %12 : vector<1x128xf32>
    %cst_11 = arith.constant 1.250000e-01 : f32
    %14 = vector.broadcast %cst_11 : f32 to vector<1x128xf32>
    %15 = arith.mulf %11, %14 : vector<1x128xf32>
    %16 = arith.mulf %13, %13 : vector<1x128xf32>
    %17 = arith.subf %15, %16 : vector<1x128xf32>
    %cst_12 = arith.constant 0.000000e+00 : f32
    %18 = vector.broadcast %cst_12 : f32 to vector<1x128xf32>
    %19 = arith.maximumf %17, %18 : vector<1x128xf32>
    %cst_13 = arith.constant 9.99999974E-6 : f32
    %20 = vector.broadcast %cst_13 : f32 to vector<1x128xf32>
    %21 = arith.addf %19, %20 : vector<1x128xf32>
    %22 = math.rsqrt %21 : vector<1x128xf32>
    %23 = arith.mulf %5, %22 : vector<1x128xf32>
    %24 = arith.mulf %13, %23 : vector<1x128xf32>
    %25 = arith.subf %6, %24 : vector<1x128xf32>
    %26 = vector.broadcast %23 : vector<1x128xf32> to vector<8x128xf32>
    %27 = arith.mulf %4, %26 : vector<8x128xf32>
    %28 = vector.broadcast %25 : vector<1x128xf32> to vector<8x128xf32>
    %29 = arith.addf %27, %28 : vector<8x128xf32>
    %cst_14 = arith.constant 0.000000e+00 : f32
    %30 = vector.broadcast %cst_14 : f32 to vector<8x128xf32>
    %31 = arith.cmpf oge, %29, %30 : vector<8x128xf32>
    %32 = vector.broadcast %0 : f32 to vector<8x128xf32>
    %33 = arith.mulf %32, %29 : vector<8x128xf32>
    %34 = arith.select %31, %29, %33 : vector<8x128xi1>, vector<8x128xf32>
    %35 = arith.truncf %34 : vector<8x128xf32> to vector<8x128xbf16>
    %c0_15 = arith.constant 0 : index
    %c0_16 = arith.constant 0 : index
    %36 = vector.load %arg3[%c0_15, %c0_16] : memref<128x128xbf16, #tpu.memory_space<vmem>>, vector<128x128xbf16>
    %cst_17 = arith.constant dense<0.000000e+00> : vector<8x128xf32>
    %37 = tpu.matmul %35, %36, %cst_17 {dimension_numbers = #tpu.dot_dimension_numbers<[1], [0], [0], [1], [0, 0, 1, 1], [], []>} : vector<8x128xbf16>, vector<128x128xbf16>, vector<8x128xf32> -> vector<8x128xf32>
    %c2 = arith.constant 2 : index
    %c0_18 = arith.constant 0 : index
    %38 = vector.load %arg5[%c2, %c0_18] : memref<8x128xf32, #tpu.memory_space<vmem>>, vector<1x128xf32>
    %c3 = arith.constant 3 : index
    %c0_19 = arith.constant 0 : index
    %39 = vector.load %arg5[%c3, %c0_19] : memref<8x128xf32, #tpu.memory_space<vmem>>, vector<1x128xf32>
    %cst_20 = arith.constant dense<0.000000e+00> : vector<128xf32>
    %40 = vector.multi_reduction <add>, %37, %cst_20 [0] : vector<8x128xf32> to vector<128xf32>
    %41 = vector.shape_cast %40 : vector<128xf32> to vector<1x128xf32>
    %42 = arith.mulf %37, %37 : vector<8x128xf32>
    %cst_21 = arith.constant dense<0.000000e+00> : vector<128xf32>
    %43 = vector.multi_reduction <add>, %42, %cst_21 [0] : vector<8x128xf32> to vector<128xf32>
    %44 = vector.shape_cast %43 : vector<128xf32> to vector<1x128xf32>
    %cst_22 = arith.constant 1.250000e-01 : f32
    %45 = vector.broadcast %cst_22 : f32 to vector<1x128xf32>
    %46 = arith.mulf %41, %45 : vector<1x128xf32>
    %cst_23 = arith.constant 1.250000e-01 : f32
    %47 = vector.broadcast %cst_23 : f32 to vector<1x128xf32>
    %48 = arith.mulf %44, %47 : vector<1x128xf32>
    %49 = arith.mulf %46, %46 : vector<1x128xf32>
    %50 = arith.subf %48, %49 : vector<1x128xf32>
    %cst_24 = arith.constant 0.000000e+00 : f32
    %51 = vector.broadcast %cst_24 : f32 to vector<1x128xf32>
    %52 = arith.maximumf %50, %51 : vector<1x128xf32>
    %cst_25 = arith.constant 9.99999974E-6 : f32
    %53 = vector.broadcast %cst_25 : f32 to vector<1x128xf32>
    %54 = arith.addf %52, %53 : vector<1x128xf32>
    %55 = math.rsqrt %54 : vector<1x128xf32>
    %56 = arith.mulf %38, %55 : vector<1x128xf32>
    %57 = arith.mulf %46, %56 : vector<1x128xf32>
    %58 = arith.subf %39, %57 : vector<1x128xf32>
    %59 = vector.broadcast %56 : vector<1x128xf32> to vector<8x128xf32>
    %60 = arith.mulf %37, %59 : vector<8x128xf32>
    %61 = vector.broadcast %58 : vector<1x128xf32> to vector<8x128xf32>
    %62 = arith.addf %60, %61 : vector<8x128xf32>
    %cst_26 = arith.constant 0.000000e+00 : f32
    %63 = vector.broadcast %cst_26 : f32 to vector<8x128xf32>
    %64 = arith.cmpf oge, %62, %63 : vector<8x128xf32>
    %65 = vector.broadcast %1 : f32 to vector<8x128xf32>
    %66 = arith.mulf %65, %62 : vector<8x128xf32>
    %67 = arith.select %64, %62, %66 : vector<8x128xi1>, vector<8x128xf32>
    %68 = arith.truncf %67 : vector<8x128xf32> to vector<8x128xbf16>
    %c0_27 = arith.constant 0 : index
    %c0_28 = arith.constant 0 : index
    %69 = vector.load %arg4[%c0_27, %c0_28] : memref<128x128xbf16, #tpu.memory_space<vmem>>, vector<128x128xbf16>
    %cst_29 = arith.constant dense<0.000000e+00> : vector<8x128xf32>
    %70 = tpu.matmul %68, %69, %cst_29 {dimension_numbers = #tpu.dot_dimension_numbers<[1], [0], [0], [1], [0, 0, 1, 1], [], []>} : vector<8x128xbf16>, vector<128x128xbf16>, vector<8x128xf32> -> vector<8x128xf32>
    %c4 = arith.constant 4 : index
    %c0_30 = arith.constant 0 : index
    %71 = vector.load %arg5[%c4, %c0_30] : memref<8x128xf32, #tpu.memory_space<vmem>>, vector<1x128xf32>
    %72 = vector.broadcast %71 : vector<1x128xf32> to vector<8x128xf32>
    %73 = arith.addf %70, %72 : vector<8x128xf32>
    %c0_31 = arith.constant 0 : index
    %c0_32 = arith.constant 0 : index
    %74 = vector.load %arg6[%c0_31, %c0_32] : memref<8x128xf32, #tpu.memory_space<vmem>>, vector<8x128xf32>
    tpu.vector_store %arg6[%c0_31, %c0_32], %73 {strides = array<i32>} : memref<8x128xf32, #tpu.memory_space<vmem>>, vector<8x128xf32>,
    return
  }
}

</mosaic_0001>

<llo_original>
// kernel: dqn_forward.1
$region0: #{dqn_forward.1}
  #allocation0 [shape = 'u32[]', space=smem, size = 0x4, offset = 0x4, fixed_abs, tag = 'smem constant byte address 0x4 - core index']
  #allocation1 [shape = 'u32[144,128]{1,0:T(1,128)}', space=vmem, size = 0x12000, scoped, tag = 'internal scratch']
  %s0 = inlined_call_operand.vmem [shape: f32[2], index: 0, kind: input, shape index: {}]
  %s1 = inlined_call_operand.vmem [shape: bf16[8,128], index: 1, kind: input, shape index: {}]
  %s2 = inlined_call_operand.hbm [shape: bf16[128,128], index: 2, kind: input, shape index: {}]
  %s3 = inlined_call_operand.hbm [shape: bf16[128,128], index: 3, kind: input, shape index: {}]
  %s4 = inlined_call_operand.hbm [shape: bf16[128,128], index: 4, kind: input, shape index: {}]
  %s5 = inlined_call_operand.vmem [shape: f32[8,128], index: 5, kind: input, shape index: {}]
  %s6 = inlined_call_operand.vmem [shape: f32[8,128], index: 6, kind: output, shape index: {}]
  %s7 = sld [smem:[#allocation0]]
  $region50: #{dqn_forward.1} parent=0
    _
  %s9 = ssub.s32 1, %s7
  %s10 = scalar_select 0, %s9, %s7
  $region1: #{dqn_forward.1} parent=0
    #allocation2 [shape = 'u8[512]{0}', space=smem, size = 0x200, scoped, tag = 'input window, operand 0, single buffered']
    #allocation3 [shape = 's32[1]{0}', space=sflag, size = 0x4, scoped, tag = 'scoped memory for dqn_forward.1']
    #allocation4 [shape = 's32[1]{0}', space=sflag, size = 0x4, scoped, tag = 'scoped memory for dqn_forward.1']
    #allocation5 [shape = 'u8[32768]{0}', space=vmem, size = 0x8000, scoped, tag = 'input window, operand 2, single buffered']
    #allocation6 [shape = 'u8[32768]{0}', space=vmem, size = 0x8000, scoped, tag = 'input window, operand 3, single buffered']
    #allocation7 [shape = 's32[1]{0}', space=sflag, size = 0x4, scoped, tag = 'scoped memory for dqn_forward.1']
    #allocation8 [shape = 'u8[32768]{0}', space=vmem, size = 0x8000, scoped, tag = 'input window, operand 4, single buffered']
    %11 = vsyncpa [#allocation4], 0
    %12 = vsyncpa [#allocation3], 0
    %13 = vsyncpa [#allocation7], 0
    // Predicated region
    $region2: #{dqn_forward.1} parent=1 // pred_check
      _
    $region3: #{dqn_forward.1} parent=1 // pred_check_branch
      %15 = sbr.rel (0) target = $region5
    $region4: #{dqn_forward.1} parent=1 // pred_region
      %s17 = ssub.s32 16, 16
      %18 = vsyncadd [#allocation4], %s17
      %s20 = sshll.u32 %s0, 4
      %s21 = int_to_ptr.vmem [resolvable:$true] %s20
      %23 = dma.vmem_to_smem %s21, 16, [#allocation2], [#allocation4]
    $region5: #{dqn_forward.1} parent=1 // pred_fallthru
      _
    // Predicated region
    $region6: #{dqn_forward.1} parent=1 // pred_check
      _
    $region7: #{dqn_forward.1} parent=1 // pred_check_branch
      %25 = sbr.rel (0) target = $region9
    $region8: #{dqn_forward.1} parent=1 // pred_region
      _
    $region9: #{dqn_forward.1} parent=1 // pred_fallthru
      _
    // Predicated region
    $region10: #{dqn_forward.1} parent=1 // pred_check
      _
    $region11: #{dqn_forward.1} parent=1 // pred_check_branch
      %27 = sbr.rel (0) target = $region13
    $region12: #{dqn_forward.1} parent=1 // pred_region
      %s29 = ssub.s32 1024, 1024
      %30 = vsyncadd [#allocation3], %s29
      %s31 = sshll.u32 [#allocation5], 4
      %s32 = int_to_ptr.vmem [resolvable:$true] %s31
      %37 = dma.hbm_to_vmem [thread:$0]  %s2, 1024, %s32, [#allocation3], 64, 64, 4
    $region13: #{dqn_forward.1} parent=1 // pred_fallthru
      _
    // Predicated region
    $region14: #{dqn_forward.1} parent=1 // pred_check
      _
    $region15: #{dqn_forward.1} parent=1 // pred_check_branch
      %39 = sbr.rel (0) target = $region17
    $region16: #{dqn_forward.1} parent=1 // pred_region
      %s41 = ssub.s32 1024, 1024
      %42 = vsyncadd [#allocation7], %s41
      %s43 = sshll.u32 [#allocation6], 4
      %s44 = int_to_ptr.vmem [resolvable:$true] %s43
      %49 = dma.hbm_to_vmem [thread:$0]  %s3, 1024, %s44, [#allocation7], 64, 64, 4
    $region17: #{dqn_forward.1} parent=1 // pred_fallthru
      _
    // Predicated region
    $region18: #{dqn_forward.1} parent=1 // pred_check
      _
    $region19: #{dqn_forward.1} parent=1 // pred_check_branch
      %51 = sbr.rel (0) target = $region21
    $region20: #{dqn_forward.1} parent=1 // pred_region
      %s53 = ssub.s32 1024, 1024
      %54 = vsyncadd [#allocation7], %s53
      %s55 = sshll.u32 [#allocation8], 4
      %s56 = int_to_ptr.vmem [resolvable:$true] %s55
      %61 = dma.hbm_to_vmem [thread:$0]  %s4, 1024, %s56, [#allocation7], 64, 64, 4
    $region21: #{dqn_forward.1} parent=1 // pred_fallthru
      _
    // Predicated region
    $region22: #{dqn_forward.1} parent=1 // pred_check
      _
    $region23: #{dqn_forward.1} parent=1 // pred_check_branch
      %63 = sbr.rel (0) target = $region25
    $region24: #{dqn_forward.1} parent=1 // pred_region
      _
    $region25: #{dqn_forward.1} parent=1 // pred_fallthru
      _
    // Predicated region
    $region26: #{dqn_forward.1} parent=1 // pred_check
      _
    $region27: #{dqn_forward.1} parent=1 // pred_check_branch
      %65 = sbr.rel (0) target = $region29
    $region28: #{dqn_forward.1} parent=1 // pred_region
      %66 = dma.done [#allocation4], 16
    $region29: #{dqn_forward.1} parent=1 // pred_fallthru
      _
    // Predicated region
    $region30: #{dqn_forward.1} parent=1 // pred_check
      _
    $region31: #{dqn_forward.1} parent=1 // pred_check_branch
      %68 = sbr.rel (0) target = $region33
    $region32: #{dqn_forward.1} parent=1 // pred_region
      %69 = dma.done [#allocation3], 1024
    $region33: #{dqn_forward.1} parent=1 // pred_fallthru
      _
    // Predicated region
    $region34: #{dqn_forward.1} parent=1 // pred_check
      _
    $region35: #{dqn_forward.1} parent=1 // pred_check_branch
      %71 = sbr.rel (0) target = $region37
    $region36: #{dqn_forward.1} parent=1 // pred_region
      %72 = dma.done [#allocation7], 1024
    $region37: #{dqn_forward.1} parent=1 // pred_fallthru
      _
    // Predicated region
    $region38: #{dqn_forward.1} parent=1 // pred_check
      _
    $region39: #{dqn_forward.1} parent=1 // pred_check_branch
      %74 = sbr.rel (0) target = $region41
    $region40: #{dqn_forward.1} parent=1 // pred_region
      %75 = dma.done [#allocation7], 1024
    $region41: #{dqn_forward.1} parent=1 // pred_fallthru
      _
    %76 = sfence
    %s78 = sld [smem:[#allocation2]]
    %s79 = sld [smem:[#allocation2 + $0x1]]
    %v80 = vld [vmem:[%s1] sm:$0xf]
    %v81 = vld [vmem:[#allocation5] sm:$0xf]
    %v82 = vld [vmem:[#allocation5 + $0x4] sm:$0xf]
    %v83 = vld [vmem:[#allocation5 + $0x8] sm:$0xf]
    %v84 = vld [vmem:[#allocation5 + $0xc] sm:$0xf]
    %v85 = vld [vmem:[#allocation5 + $0x10] sm:$0xf]
    %v86 = vld [vmem:[#allocation5 + $0x14] sm:$0xf]
    %v87 = vld [vmem:[#allocation5 + $0x18] sm:$0xf]
    %v88 = vld [vmem:[#allocation5 + $0x1c] sm:$0xf]
    %v89 = vld [vmem:[#allocation5 + $0x20] sm:$0xf]
    %v90 = vld [vmem:[#allocation5 + $0x24] sm:$0xf]
    %v91 = vld [vmem:[#allocation5 + $0x28] sm:$0xf]
    %v92 = vld [vmem:[#allocation5 + $0x2c] sm:$0xf]
    %v93 = vld [vmem:[#allocation5 + $0x30] sm:$0xf]
    %v94 = vld [vmem:[#allocation5 + $0x34] sm:$0xf]
    %v95 = vld [vmem:[#allocation5 + $0x38] sm:$0xf]
    %v96 = vld [vmem:[#allocation5 + $0x3c] sm:$0xf]
    %v113 = vunpack.c.l.b16 %v81
    %v114 = vunpack.c.l.b16 %v82
    %v115 = vunpack.c.l.b16 %v83
    %v116 = vunpack.c.l.b16 %v84
    %v117 = vunpack.c.l.b16 %v85
    %v118 = vunpack.c.l.b16 %v86
    %v119 = vunpack.c.l.b16 %v87
    %v120 = vunpack.c.l.b16 %v88
    %v121 = vunpack.c.l.b16 %v89
    %v122 = vunpack.c.l.b16 %v90
    %v123 = vunpack.c.l.b16 %v91
    %v124 = vunpack.c.l.b16 %v92
    %v125 = vunpack.c.l.b16 %v93
    %v126 = vunpack.c.l.b16 %v94
    %v127 = vunpack.c.l.b16 %v95
    %v128 = vunpack.c.l.b16 %v96
    %v129 = vpack.c.b16 %v114, %v113
    %v130 = vpack.c.b16 %v116, %v115
    %v131 = vpack.c.b16 %v118, %v117
    %v132 = vpack.c.b16 %v120, %v119
    %v133 = vpack.c.b16 %v122, %v121
    %v134 = vpack.c.b16 %v124, %v123
    %v135 = vpack.c.b16 %v126, %v125
    %v136 = vpack.c.b16 %v128, %v127
    %145 = vmatprep.subr.bf16.mxu0 0
    %146 = vmatpush1.bf16.msra.mxu0 %v136
    %147 = vmatprep.subr.bf16.mxu0 0
    %148 = vmatpush1.bf16.msra.mxu0 %v135
    %149 = vmatprep.subr.bf16.mxu0 0
    %150 = vmatpush1.bf16.msra.mxu0 %v134
    %151 = vmatprep.subr.bf16.mxu0 0
    %152 = vmatpush1.bf16.msra.mxu0 %v133
    %153 = vmatprep.subr.bf16.mxu0 0
    %154 = vmatpush1.bf16.msra.mxu0 %v132
    %155 = vmatprep.subr.bf16.mxu0 0
    %156 = vmatpush1.bf16.msra.mxu0 %v131
    %157 = vmatprep.subr.bf16.mxu0 0
    %158 = vmatpush1.bf16.msra.mxu0 %v130
    %159 = vmatprep.subr.bf16.mxu0 0
    %160 = vmatpush1.bf16.msra.mxu0 %v129
    %161 = vmatprep.subr.bf16.mxu0 0
    %162 = vmatpush2.bf16.msra.mxu0 0
    %163 = vmatprep.subr.bf16.mxu0 0
    %164 = vmatpush2.bf16.msra.mxu0 0
    %165 = vmatprep.subr.bf16.mxu0 0
    %166 = vmatpush2.bf16.msra.mxu0 0
    %167 = vmatprep.subr.bf16.mxu0 0
    %168 = vmatpush2.bf16.msra.mxu0 0
    %169 = vmatprep.subr.bf16.mxu0 0
    %170 = vmatpush2.bf16.msra.mxu0 0
    %171 = vmatprep.subr.bf16.mxu0 0
    %172 = vmatpush2.bf16.msra.mxu0 0
    %173 = vmatprep.subr.bf16.mxu0 0
    %174 = vmatpush2.bf16.msra.mxu0 0
    %175 = vmatprep.subr.bf16.mxu0 0
    %176 = vmatpush2.bf16.msra.mxu0 0
    %177 = vmatprep.mubr.bf16.mxu0 0
    %178 = vmatmul.mubr.bf16.gmra.mxu0 %v80
    %v179 = vpop.f32.mrf.mxu0
    %v180 = vadd.f32 0.0, %v179
    %v181 = vpop.f32.mrf.mxu0
    %v182 = vpop.f32.mrf.mxu0
    %v183 = vpop.f32.mrf.mxu0
    %184 = vdwg.mxu0
    %v185 = vld [vmem:[%s5] sm:$0x1]
    %v186 = vld [vmem:[%s5 + $0x1] sm:$0x1]
    %v187 = vrot.slane %v180, 4
    %v188 = vadd.f32 %v180, %v187
    %v189 = vrot.slane %v188, 2
    %v190 = vadd.f32 %v188, %v189
    %v191 = vrot.slane %v190, 1
    %v192 = vadd.f32 %v190, %v191
    %v193 = vmul.f32 %v180, %v180
    %v194 = vrot.slane %v193, 4
    %v195 = vadd.f32 %v193, %v194
    %v196 = vrot.slane %v195, 2
    %v197 = vadd.f32 %v195, %v196
    %v198 = vrot.slane %v197, 1
    %v199 = vadd.f32 %v197, %v198
    %v200 = vmul.f32 %v192, 0.125
    %v201 = vmul.f32 %v199, 0.125
    %v202 = vmul.f32 %v200, %v200
    %v203 = vsub.f32 %v201, %v202
    %v204 = vmax.f32 %v203, 0.0
    %v205 = vadd.f32 %v204, 1e-05
    %v206 = vrsqrt.pop %v205
    %v207 = vmul.f32 %v185, %v206
    %v208 = vmul.f32 %v200, %v207
    %v209 = vsub.f32 %v186, %v208
    %v210 = vlaneseq
    %v211 = vshrl.u32 %v210, 7
    %v212 = vsub.s32 0, %v211
    %v213 = vrot.slane %v207, %v212
    %v214 = vmul.f32 %v180, %v213
    %v215 = vlaneseq
    %v216 = vshrl.u32 %v215, 7
    %v217 = vsub.s32 0, %v216
    %v218 = vrot.slane %v209, %v217
    %v219 = vadd.f32 %v214, %v218
    %vm220 = vcmp.ge.f32.partialorder %v219, 0.0
    %v221 = vstv %s78
    %v222 = vmul.f32 %v221, %v219
    %v223 = vsel %vm220, %v219, %v222
    %v224 = vpack.c.bf16 %v223, %v223
    %v225 = vld [vmem:[#allocation6] sm:$0xf]
    %v226 = vld [vmem:[#allocation6 + $0x4] sm:$0xf]
    %v227 = vld [vmem:[#allocation6 + $0x8] sm:$0xf]
    %v228 = vld [vmem:[#allocation6 + $0xc] sm:$0xf]
    %v229 = vld [vmem:[#allocation6 + $0x10] sm:$0xf]
    %v230 = vld [vmem:[#allocation6 + $0x14] sm:$0xf]
    %v231 = vld [vmem:[#allocation6 + $0x18] sm:$0xf]
    %v232 = vld [vmem:[#allocation6 + $0x1c] sm:$0xf]
    %v233 = vld [vmem:[#allocation6 + $0x20] sm:$0xf]
    %v234 = vld [vmem:[#allocation6 + $0x24] sm:$0xf]
    %v235 = vld [vmem:[#allocation6 + $0x28] sm:$0xf]
    %v236 = vld [vmem:[#allocation6 + $0x2c] sm:$0xf]
    %v237 = vld [vmem:[#allocation6 + $0x30] sm:$0xf]
    %v238 = vld [vmem:[#allocation6 + $0x34] sm:$0xf]
    %v239 = vld [vmem:[#allocation6 + $0x38] sm:$0xf]
    %v240 = vld [vmem:[#allocation6 + $0x3c] sm:$0xf]
    %v257 = vunpack.c.l.b16 %v225
    %v258 = vunpack.c.l.b16 %v226
    %v259 = vunpack.c.l.b16 %v227
    %v260 = vunpack.c.l.b16 %v228
    %v261 = vunpack.c.l.b16 %v229
    %v262 = vunpack.c.l.b16 %v230
    %v263 = vunpack.c.l.b16 %v231
    %v264 = vunpack.c.l.b16 %v232
    %v265 = vunpack.c.l.b16 %v233
    %v266 = vunpack.c.l.b16 %v234
    %v267 = vunpack.c.l.b16 %v235
    %v268 = vunpack.c.l.b16 %v236
    %v269 = vunpack.c.l.b16 %v237
    %v270 = vunpack.c.l.b16 %v238
    %v271 = vunpack.c.l.b16 %v239
    %v272 = vunpack.c.l.b16 %v240
    %v273 = vpack.c.b16 %v258, %v257
    %v274 = vpack.c.b16 %v260, %v259
    %v275 = vpack.c.b16 %v262, %v261
    %v276 = vpack.c.b16 %v264, %v263
    %v277 = vpack.c.b16 %v266, %v265
    %v278 = vpack.c.b16 %v268, %v267
    %v279 = vpack.c.b16 %v270, %v269
    %v280 = vpack.c.b16 %v272, %v271
    %289 = vmatprep.subr.bf16.mxu0 0
    %290 = vmatpush1.bf16.msra.mxu0 %v280
    %291 = vmatprep.subr.bf16.mxu0 0
    %292 = vmatpush1.bf16.msra.mxu0 %v279
    %293 = vmatprep.subr.bf16.mxu0 0
    %294 = vmatpush1.bf16.msra.mxu0 %v278
    %295 = vmatprep.subr.bf16.mxu0 0
    %296 = vmatpush1.bf16.msra.mxu0 %v277
    %297 = vmatprep.subr.bf16.mxu0 0
    %298 = vmatpush1.bf16.msra.mxu0 %v276
    %299 = vmatprep.subr.bf16.mxu0 0
    %300 = vmatpush1.bf16.msra.mxu0 %v275
    %301 = vmatprep.subr.bf16.mxu0 0
    %302 = vmatpush1.bf16.msra.mxu0 %v274
    %303 = vmatprep.subr.bf16.mxu0 0
    %304 = vmatpush1.bf16.msra.mxu0 %v273
    %305 = vmatprep.subr.bf16.mxu0 0
    %306 = vmatpush2.bf16.msra.mxu0 0
    %307 = vmatprep.subr.bf16.mxu0 0
    %308 = vmatpush2.bf16.msra.mxu0 0
    %309 = vmatprep.subr.bf16.mxu0 0
    %310 = vmatpush2.bf16.msra.mxu0 0
    %311 = vmatprep.subr.bf16.mxu0 0
    %312 = vmatpush2.bf16.msra.mxu0 0
    %313 = vmatprep.subr.bf16.mxu0 0
    %314 = vmatpush2.bf16.msra.mxu0 0
    %315 = vmatprep.subr.bf16.mxu0 0
    %316 = vmatpush2.bf16.msra.mxu0 0
    %317 = vmatprep.subr.bf16.mxu0 0
    %318 = vmatpush2.bf16.msra.mxu0 0
    %319 = vmatprep.subr.bf16.mxu0 0
    %320 = vmatpush2.bf16.msra.mxu0 0
    %321 = vmatprep.mubr.bf16.mxu0 0
    %322 = vmatmul.mubr.bf16.gmra.mxu0 %v224
    %v323 = vpop.f32.mrf.mxu0
    %v324 = vadd.f32 0.0, %v323
    %v325 = vpop.f32.mrf.mxu0
    %v326 = vpop.f32.mrf.mxu0
    %v327 = vpop.f32.mrf.mxu0
    %328 = vdwg.mxu0
    %v329 = vld [vmem:[%s5 + $0x2] sm:$0x1]
    %v330 = vld [vmem:[%s5 + $0x3] sm:$0x1]
    %v331 = vrot.slane %v324, 4
    %v332 = vadd.f32 %v324, %v331
    %v333 = vrot.slane %v332, 2
    %v334 = vadd.f32 %v332, %v333
    %v335 = vrot.slane %v334, 1
    %v336 = vadd.f32 %v334, %v335
    %v337 = vmul.f32 %v324, %v324
    %v338 = vrot.slane %v337, 4
    %v339 = vadd.f32 %v337, %v338
    %v340 = vrot.slane %v339, 2
    %v341 = vadd.f32 %v339, %v340
    %v342 = vrot.slane %v341, 1
    %v343 = vadd.f32 %v341, %v342
    %v344 = vmul.f32 %v336, 0.125
    %v345 = vmul.f32 %v343, 0.125
    %v346 = vmul.f32 %v344, %v344
    %v347 = vsub.f32 %v345, %v346
    %v348 = vmax.f32 %v347, 0.0
    %v349 = vadd.f32 %v348, 1e-05
    %v350 = vrsqrt.pop %v349
    %v351 = vmul.f32 %v329, %v350
    %v352 = vmul.f32 %v344, %v351
    %v353 = vsub.f32 %v330, %v352
    %v354 = vlaneseq
    %v355 = vshrl.u32 %v354, 7
    %v356 = vsub.s32 0, %v355
    %v357 = vrot.slane %v351, %v356
    %v358 = vmul.f32 %v324, %v357
    %v359 = vlaneseq
    %v360 = vshrl.u32 %v359, 7
    %v361 = vsub.s32 0, %v360
    %v362 = vrot.slane %v353, %v361
    %v363 = vadd.f32 %v358, %v362
    %vm364 = vcmp.ge.f32.partialorder %v363, 0.0
    %v365 = vstv %s79
    %v366 = vmul.f32 %v365, %v363
    %v367 = vsel %vm364, %v363, %v366
    %v368 = vpack.c.bf16 %v367, %v367
    %v369 = vld [vmem:[#allocation8] sm:$0xf]
    %v370 = vld [vmem:[#allocation8 + $0x4] sm:$0xf]
    %v371 = vld [vmem:[#allocation8 + $0x8] sm:$0xf]
    %v372 = vld [vmem:[#allocation8 + $0xc] sm:$0xf]
    %v373 = vld [vmem:[#allocation8 + $0x10] sm:$0xf]
    %v374 = vld [vmem:[#allocation8 + $0x14] sm:$0xf]
    %v375 = vld [vmem:[#allocation8 + $0x18] sm:$0xf]
    %v376 = vld [vmem:[#allocation8 + $0x1c] sm:$0xf]
    %v377 = vld [vmem:[#allocation8 + $0x20] sm:$0xf]
    %v378 = vld [vmem:[#allocation8 + $0x24] sm:$0xf]
    %v379 = vld [vmem:[#allocation8 + $0x28] sm:$0xf]
    %v380 = vld [vmem:[#allocation8 + $0x2c] sm:$0xf]
    %v381 = vld [vmem:[#allocation8 + $0x30] sm:$0xf]
    %v382 = vld [vmem:[#allocation8 + $0x34] sm:$0xf]
    %v383 = vld [vmem:[#allocation8 + $0x38] sm:$0xf]
    %v384 = vld [vmem:[#allocation8 + $0x3c] sm:$0xf]
    %v385 = vld [vmem:[%s5 + $0x4] sm:$0x1]
    %v386 = vlaneseq
    %v387 = vshrl.u32 %v386, 7
    %v388 = vsub.s32 0, %v387
    %v389 = vrot.slane %v385, %v388
    %v406 = vunpack.c.l.b16 %v369
    %v407 = vunpack.c.l.b16 %v370
    %v408 = vunpack.c.l.b16 %v371
    %v409 = vunpack.c.l.b16 %v372
    %v410 = vunpack.c.l.b16 %v373
    %v411 = vunpack.c.l.b16 %v374
    %v412 = vunpack.c.l.b16 %v375
    %v413 = vunpack.c.l.b16 %v376
    %v414 = vunpack.c.l.b16 %v377
    %v415 = vunpack.c.l.b16 %v378
    %v416 = vunpack.c.l.b16 %v379
    %v417 = vunpack.c.l.b16 %v380
    %v418 = vunpack.c.l.b16 %v381
    %v419 = vunpack.c.l.b16 %v382
    %v420 = vunpack.c.l.b16 %v383
    %v421 = vunpack.c.l.b16 %v384
    %v422 = vpack.c.b16 %v407, %v406
    %v423 = vpack.c.b16 %v409, %v408
    %v424 = vpack.c.b16 %v411, %v410
    %v425 = vpack.c.b16 %v413, %v412
    %v426 = vpack.c.b16 %v415, %v414
    %v427 = vpack.c.b16 %v417, %v416
    %v428 = vpack.c.b16 %v419, %v418
    %v429 = vpack.c.b16 %v421, %v420
    %438 = vmatprep.subr.bf16.mxu0 0
    %439 = vmatpush1.bf16.msra.mxu0 %v429
    %440 = vmatprep.subr.bf16.mxu0 0
    %441 = vmatpush1.bf16.msra.mxu0 %v428
    %442 = vmatprep.subr.bf16.mxu0 0
    %443 = vmatpush1.bf16.msra.mxu0 %v427
    %444 = vmatprep.subr.bf16.mxu0 0
    %445 = vmatpush1.bf16.msra.mxu0 %v426
    %446 = vmatprep.subr.bf16.mxu0 0
    %447 = vmatpush1.bf16.msra.mxu0 %v425
    %448 = vmatprep.subr.bf16.mxu0 0
    %449 = vmatpush1.bf16.msra.mxu0 %v424
    %450 = vmatprep.subr.bf16.mxu0 0
    %451 = vmatpush1.bf16.msra.mxu0 %v423
    %452 = vmatprep.subr.bf16.mxu0 0
    %453 = vmatpush1.bf16.msra.mxu0 %v422
    %454 = vmatprep.subr.bf16.mxu0 0
    %455 = vmatpush2.bf16.msra.mxu0 0
    %456 = vmatprep.subr.bf16.mxu0 0
    %457 = vmatpush2.bf16.msra.mxu0 0
    %458 = vmatprep.subr.bf16.mxu0 0
    %459 = vmatpush2.bf16.msra.mxu0 0
    %460 = vmatprep.subr.bf16.mxu0 0
    %461 = vmatpush2.bf16.msra.mxu0 0
    %462 = vmatprep.subr.bf16.mxu0 0
    %463 = vmatpush2.bf16.msra.mxu0 0
    %464 = vmatprep.subr.bf16.mxu0 0
    %465 = vmatpush2.bf16.msra.mxu0 0
    %466 = vmatprep.subr.bf16.mxu0 0
    %467 = vmatpush2.bf16.msra.mxu0 0
    %468 = vmatprep.subr.bf16.mxu0 0
    %469 = vmatpush2.bf16.msra.mxu0 0
    %470 = vmatprep.mubr.bf16.mxu0 0
    %471 = vmatmul.mubr.bf16.gmra.mxu0 %v368
    %v472 = vpop.f32.mrf.mxu0
    %v473 = vadd.f32 %v389, %v472
    %v474 = vpop.f32.mrf.mxu0
    %v475 = vpop.f32.mrf.mxu0
    %v476 = vpop.f32.mrf.mxu0
    %477 = vdwg.mxu0
    %478 = vst [vmem:[%s6] sm:$0xff] %v473
    // Predicated region
    $region42: #{dqn_forward.1} parent=1 // pred_check
      _
    $region43: #{dqn_forward.1} parent=1 // pred_check_branch
      %480 = sbr.rel (0) target = $region45
    $region44: #{dqn_forward.1} parent=1 // pred_region
      _
    $region45: #{dqn_forward.1} parent=1 // pred_fallthru
      _
    // Predicated region
    $region46: #{dqn_forward.1} parent=1 // pred_check
      _
    $region47: #{dqn_forward.1} parent=1 // pred_check_branch
      %482 = sbr.rel (0) target = $region49
    $region48: #{dqn_forward.1} parent=1 // pred_region
      _
    $region49: #{dqn_forward.1} parent=1 // pred_fallthru
      _
    %483 = vsyncpa [#allocation3], 1
    %484 = vsyncpa [#allocation7], 1
    %485 = vsyncpa [#allocation4], 1

</llo_original>
